<compile_context>
chip_gen: v5e
topology: v5e:2x2
jax: 0.10.0
libtpu: 0.0.40
codegen_flags: <defaults>
</compile_context>

<pallas_src>
import functools

import jax
import jax.numpy as jnp
from jax.experimental import pallas as pl
from jax.experimental.pallas import tpu as pltpu

LANE = 128
SUBLANE = 8


def _round_up(n, m):
    return ((n + m - 1) // m) * m


def mlp_kernel(x_ref,
               w1_ref, b1_ref,
               w2_ref, b2_ref,
               w3_ref, b3_ref,
               w4_ref, b4_ref,
               o_ref):
    """Four fused stages: MXU matmul (f32 accumulation) + bias + tanh (EUP)."""
    cdt = w1_ref.dtype          # MXU input dtype: f32, or bf16 on v6e/v7x path
    h = x_ref[...].astype(cdt)
    h = jnp.tanh(jnp.dot(h, w1_ref[...],
                         preferred_element_type=jnp.float32) + b1_ref[...])
    h = jnp.tanh(jnp.dot(h.astype(cdt), w2_ref[...],
                         preferred_element_type=jnp.float32) + b2_ref[...])
    h = jnp.tanh(jnp.dot(h.astype(cdt), w3_ref[...],
                         preferred_element_type=jnp.float32) + b3_ref[...])
    h = jnp.tanh(jnp.dot(h.astype(cdt), w4_ref[...],
                         preferred_element_type=jnp.float32) + b4_ref[...])
    o_ref[...] = h.astype(o_ref.dtype)


def init_params(key, input_dim, h1, h2, h3, output_dim):
    """Deterministic init mirroring the PyTorch module:
       weights ~ U(0, 1)                              (nn.init.uniform_(w, 0, 1))
       biases  ~ U(-1/sqrt(fan_in), 1/sqrt(fan_in))   (default nn.Linear bias)
    Weights stored as (in, out); forward is x @ W + b."""
    dims = [(input_dim, h1), (h1, h2), (h2, h3), (h3, output_dim)]
    params = []
    for (fan_in, fan_out) in dims:
        key, kw, kb = jax.random.split(key, 3)
        w = jax.random.uniform(kw, (fan_in, fan_out), dtype=jnp.float32,
                               minval=0.0, maxval=1.0)
        bound = 1.0 / jnp.sqrt(jnp.float32(fan_in))
        b = jax.random.uniform(kb, (1, fan_out), dtype=jnp.float32,
                               minval=-bound, maxval=bound)
        params.append((w, b))
    return params


def prepare_params(params, compute_dtype=jnp.float32):
    """One-time padding (hoisted out of the forward path).

    Zero-pads each layer's N (output/lane) dim to a multiple of 128, and each
    layer's K (row) dim to match the previous layer's padded N.  The first
    layer's K stays at the real in_dim (no lane-padding of x).  Zero weight
    columns + zero bias pads keep padded channels exactly 0 through tanh, so
    valid outputs are unchanged.  Weights are cast to `compute_dtype` (bf16 on
    v6e/v7x for 2x MXU rate and half the DMA bytes); biases stay f32.
    """
    padded = []
    prev_n_padded = params[0][0].shape[0]          # first K = real in_dim
    for (w, b) in params:
        k, n = w.shape
        n_pad = _round_up(n, LANE)
        wp = jnp.pad(w, ((0, prev_n_padded - k), (0, n_pad - n))).astype(compute_dtype)
        bp = jnp.pad(b, ((0, 0), (0, n_pad - n))).astype(jnp.float32)
        padded.append((wp, bp))
        prev_n_padded = n_pad
    return tuple(padded)


@functools.partial(jax.jit, static_argnames=("out_dim", "tile_b"))
def mlp_forward(x, padded_params, *, out_dim, tile_b=256):
    """x: (B, in_dim) f32; padded_params from prepare_params()."""
    (w1, b1), (w2, b2), (w3, b3), (w4, b4) = padded_params
    B, in_dim = x.shape
    assert w1.shape[0] == in_dim, "first-layer K must equal in_dim (unpadded)"
    d1, d2, d3, d4 = w1.shape[1], w2.shape[1], w3.shape[1], w4.shape[1]

    # Batch tile: multiple of 8 (f32 sublane tile); cap so that both v7x
    # TensorCores get work whenever B permits.  Default 256 suits v6e/v7x's
    # 256-wide MXU; prefer tile_b=128 on v5e (4x128 MXU, 1 vst slot).
    tb = _round_up(max(1, min(tile_b, B)), SUBLANE)
    if B >= 2 * SUBLANE:
        tb = min(tb, _round_up(pl.cdiv(B, 2), SUBLANE))
    num_tiles = pl.cdiv(B, tb)

    # VMEM budget: single-buffered resident weights/biases + double-buffered
    # x/out tiles.  v7x has 64 MiB physical (32 MiB scoped default) vs 128 MiB
    # on v5e/v6e.
    resident_bytes = sum(int(a.size) * a.dtype.itemsize
                         for pair in padded_params for a in pair)
    stream_bytes = 2 * tb * (in_dim * x.dtype.itemsize + d4 * 4)
    if resident_bytes + stream_bytes > 40 * 1024 * 1024:
        # TODO(synk): add a hidden-dim reduction grid axis with a pl.when-gated
        # f32 accumulator once the weights no longer fit VMEM-resident (v7x).
        raise ValueError("MLP layers too large for VMEM-resident weights; "
                         "add a K-reduction grid axis.")

    def resident_spec(a):
        # Constant index_map => never re-DMA'd across batch tiles; Buffered(1)
        # keeps a single copy in VMEM instead of a double buffer.
        return pl.BlockSpec(a.shape, lambda i: (0, 0),
                            pipeline_mode=pl.Buffered(1))

    # Cost estimate from real batch / unpadded K dims (padded N dims are what
    # the kernel actually computes / DMAs).
    flops = 2 * B * (in_dim * d1 + d1 * d2 + d2 * d3 + d3 * d4)
    transcendentals = B * (d1 + d2 + d3 + d4)
    bytes_accessed = (int(x.size) * x.dtype.itemsize    # x read (real in_dim)
                      + B * d4 * 4                      # output write
                      + resident_bytes)                 # weights + biases read

    out = pl.pallas_call(
        mlp_kernel,
        out_shape=jax.ShapeDtypeStruct((B, d4), jnp.float32),
        grid=(num_tiles,),
        in_specs=[
            # x streams per batch tile; last dim == full array dim (no pad).
            pl.BlockSpec((tb, in_dim), lambda i: (i, 0)),
            resident_spec(w1), resident_spec(b1),
            resident_spec(w2), resident_spec(b2),
            resident_spec(w3), resident_spec(b3),
            resident_spec(w4), resident_spec(b4),
        ],
        out_specs=pl.BlockSpec((tb, d4), lambda i: (i, 0)),
        compiler_params=pltpu.CompilerParams(
            dimension_semantics=("parallel",)),
        cost_estimate=pl.CostEstimate(
            flops=flops,
            transcendentals=transcendentals,
            bytes_accessed=bytes_accessed),
    )(x, w1, b1, w2, b2, w3, b3, w4, b4)

    return out[:, :out_dim]


def reference_forward(x, params):
    h = x
    for (w, b) in params:
        h = jnp.tanh(h @ w + b)
    return h


if __name__ == "__main__":
    # Small shapes consistent with the module's forward (plain MLP on 2-D input).
    input_dim, hidden_dim1, hidden_dim2, hidden_dim3, output_dim = 16, 32, 32, 32, 4

    key = jax.random.PRNGKey(0)
    key, kdata = jax.random.split(key)
    params = init_params(key, input_dim, hidden_dim1, hidden_dim2,
                         hidden_dim3, output_dim)

    # --- f32 path (matches the JAX reference to 1e-5) --------------------
    padded_f32 = prepare_params(params, compute_dtype=jnp.float32)
    for batch in (32, 19):   # even split across 2 tiles, and a ragged last tile
        kdata, kx = jax.random.split(kdata)
        x = jax.random.normal(kx, (batch, input_dim), dtype=jnp.float32)
        out = jax.block_until_ready(mlp_forward(x, padded_f32, out_dim=output_dim))
        ref = reference_forward(x, params)
        assert out.shape == (batch, output_dim)
        assert jnp.allclose(out, ref, atol=1e-5, rtol=1e-5), \
            f"f32 mismatch vs JAX reference (batch={batch})"

    # --- bf16 weight/activation path (f32 MXU accumulation), v6e/v7x -----
    padded_bf16 = prepare_params(params, compute_dtype=jnp.bfloat16)
    kdata, kx = jax.random.split(kdata)
    x = jax.random.normal(kx, (32, input_dim), dtype=jnp.float32)
    out_bf16 = jax.block_until_ready(mlp_forward(x, padded_bf16, out_dim=output_dim))
    ref = reference_forward(x, params)
    assert out_bf16.shape == (32, output_dim)
    assert jnp.allclose(out_bf16, ref, atol=5e-2, rtol=5e-2), \
        "bf16 mismatch vs JAX reference (loose tolerance)"

    print("KERNEL_OK")
</pallas_src>

<mosaic_0001>
module attributes {stable_mosaic.version = 11 : i64} {
  func.func @mlp_kernel(%arg0: i32, %arg1: memref<16x16xf32, #tpu.memory_space<vmem>>, %arg2: memref<16x128xf32, #tpu.memory_space<vmem>>, %arg3: memref<1x128xf32, #tpu.memory_space<vmem>>, %arg4: memref<128x128xf32, #tpu.memory_space<vmem>>, %arg5: memref<1x128xf32, #tpu.memory_space<vmem>>, %arg6: memref<128x128xf32, #tpu.memory_space<vmem>>, %arg7: memref<1x128xf32, #tpu.memory_space<vmem>>, %arg8: memref<128x128xf32, #tpu.memory_space<vmem>>, %arg9: memref<1x128xf32, #tpu.memory_space<vmem>>, %arg10: memref<16x128xf32, #tpu.memory_space<vmem>>) attributes {dimension_semantics = [#tpu.dimension_semantics<parallel>], iteration_bounds = array<i64: 2>, scalar_prefetch = 0 : i64, scratch_operands = 0 : i64, tpu.core_type = #tpu.core_type<tc>, window_params = [{transform_indices = @transform_0, window_bounds = array<i64: 16, 16>}, {pipeline_mode = #tpu.pipeline_mode<synchronous>, transform_indices = @transform_1, window_bounds = array<i64: 16, 128>}, {pipeline_mode = #tpu.pipeline_mode<synchronous>, transform_indices = @transform_2, window_bounds = array<i64: 1, 128>}, {pipeline_mode = #tpu.pipeline_mode<synchronous>, transform_indices = @transform_3, window_bounds = array<i64: 128, 128>}, {pipeline_mode = #tpu.pipeline_mode<synchronous>, transform_indices = @transform_4, window_bounds = array<i64: 1, 128>}, {pipeline_mode = #tpu.pipeline_mode<synchronous>, transform_indices = @transform_5, window_bounds = array<i64: 128, 128>}, {pipeline_mode = #tpu.pipeline_mode<synchronous>, transform_indices = @transform_6, window_bounds = array<i64: 1, 128>}, {pipeline_mode = #tpu.pipeline_mode<synchronous>, transform_indices = @transform_7, window_bounds = array<i64: 128, 128>}, {pipeline_mode = #tpu.pipeline_mode<synchronous>, transform_indices = @transform_8, window_bounds = array<i64: 1, 128>}, {transform_indices = @transform_9, window_bounds = array<i64: 16, 128>}]} {
    %c0 = arith.constant 0 : index
    %c0_0 = arith.constant 0 : index
    %0 = vector.load %arg1[%c0, %c0_0] : memref<16x16xf32, #tpu.memory_space<vmem>>, vector<16x16xf32>
    %c0_1 = arith.constant 0 : index
    %c0_2 = arith.constant 0 : index
    %1 = vector.load %arg2[%c0_1, %c0_2] : memref<16x128xf32, #tpu.memory_space<vmem>>, vector<16x128xf32>
    %cst = arith.constant dense<0.000000e+00> : vector<16x128xf32>
    %2 = tpu.matmul %0, %1, %cst {dimension_numbers = #tpu.dot_dimension_numbers<[1], [0], [0], [1], [0, 0, 1, 1], [], []>} : vector<16x16xf32>, vector<16x128xf32>, vector<16x128xf32> -> vector<16x128xf32>
    %c0_3 = arith.constant 0 : index
    %c0_4 = arith.constant 0 : index
    %3 = vector.load %arg3[%c0_3, %c0_4] : memref<1x128xf32, #tpu.memory_space<vmem>>, vector<1x128xf32>
    %4 = vector.broadcast %3 : vector<1x128xf32> to vector<16x128xf32>
    %5 = arith.addf %2, %4 : vector<16x128xf32>
    %6 = math.tanh %5 : vector<16x128xf32>
    %c0_5 = arith.constant 0 : index
    %c0_6 = arith.constant 0 : index
    %7 = vector.load %arg4[%c0_5, %c0_6] : memref<128x128xf32, #tpu.memory_space<vmem>>, vector<128x128xf32>
    %cst_7 = arith.constant dense<0.000000e+00> : vector<16x128xf32>
    %8 = tpu.matmul %6, %7, %cst_7 {dimension_numbers = #tpu.dot_dimension_numbers<[1], [0], [0], [1], [0, 0, 1, 1], [], []>} : vector<16x128xf32>, vector<128x128xf32>, vector<16x128xf32> -> vector<16x128xf32>
    %c0_8 = arith.constant 0 : index
    %c0_9 = arith.constant 0 : index
    %9 = vector.load %arg5[%c0_8, %c0_9] : memref<1x128xf32, #tpu.memory_space<vmem>>, vector<1x128xf32>
    %10 = vector.broadcast %9 : vector<1x128xf32> to vector<16x128xf32>
    %11 = arith.addf %8, %10 : vector<16x128xf32>
    %12 = math.tanh %11 : vector<16x128xf32>
    %c0_10 = arith.constant 0 : index
    %c0_11 = arith.constant 0 : index
    %13 = vector.load %arg6[%c0_10, %c0_11] : memref<128x128xf32, #tpu.memory_space<vmem>>, vector<128x128xf32>
    %cst_12 = arith.constant dense<0.000000e+00> : vector<16x128xf32>
    %14 = tpu.matmul %12, %13, %cst_12 {dimension_numbers = #tpu.dot_dimension_numbers<[1], [0], [0], [1], [0, 0, 1, 1], [], []>} : vector<16x128xf32>, vector<128x128xf32>, vector<16x128xf32> -> vector<16x128xf32>
    %c0_13 = arith.constant 0 : index
    %c0_14 = arith.constant 0 : index
    %15 = vector.load %arg7[%c0_13, %c0_14] : memref<1x128xf32, #tpu.memory_space<vmem>>, vector<1x128xf32>
    %16 = vector.broadcast %15 : vector<1x128xf32> to vector<16x128xf32>
    %17 = arith.addf %14, %16 : vector<16x128xf32>
    %18 = math.tanh %17 : vector<16x128xf32>
    %c0_15 = arith.constant 0 : index
    %c0_16 = arith.constant 0 : index
    %19 = vector.load %arg8[%c0_15, %c0_16] : memref<128x128xf32, #tpu.memory_space<vmem>>, vector<128x128xf32>
    %cst_17 = arith.constant dense<0.000000e+00> : vector<16x128xf32>
    %20 = tpu.matmul %18, %19, %cst_17 {dimension_numbers = #tpu.dot_dimension_numbers<[1], [0], [0], [1], [0, 0, 1, 1], [], []>} : vector<16x128xf32>, vector<128x128xf32>, vector<16x128xf32> -> vector<16x128xf32>
    %c0_18 = arith.constant 0 : index
    %c0_19 = arith.constant 0 : index
    %21 = vector.load %arg9[%c0_18, %c0_19] : memref<1x128xf32, #tpu.memory_space<vmem>>, vector<1x128xf32>
    %22 = vector.broadcast %21 : vector<1x128xf32> to vector<16x128xf32>
    %23 = arith.addf %20, %22 : vector<16x128xf32>
    %24 = math.tanh %23 : vector<16x128xf32>
    %c0_20 = arith.constant 0 : index
    %c0_21 = arith.constant 0 : index
    %25 = vector.load %arg10[%c0_20, %c0_21] : memref<16x128xf32, #tpu.memory_space<vmem>>, vector<16x128xf32>
    tpu.vector_store %arg10[%c0_20, %c0_21], %24 {strides = array<i32>} : memref<16x128xf32, #tpu.memory_space<vmem>>, vector<16x128xf32>,
    return
  }
  func.func @transform_0(%arg0: i32) -> (i32, i32) {
    %c0_i32 = arith.constant 0 : i32
    %c0_i32_0 = arith.constant 0 : i32
    return %arg0, %c0_i32 : i32, i32
  }
  func.func @transform_1(%arg0: i32) -> (i32, i32) {
    %c0_i32 = arith.constant 0 : i32
    %c0_i32_0 = arith.constant 0 : i32
    %c0_i32_1 = arith.constant 0 : i32
    return %c0_i32, %c0_i32_0 : i32, i32
  }
  func.func @transform_2(%arg0: i32) -> (i32, i32) {
    %c0_i32 = arith.constant 0 : i32
    %c0_i32_0 = arith.constant 0 : i32
    %c0_i32_1 = arith.constant 0 : i32
    return %c0_i32, %c0_i32_0 : i32, i32
  }
  func.func @transform_3(%arg0: i32) -> (i32, i32) {
    %c0_i32 = arith.constant 0 : i32
    %c0_i32_0 = arith.constant 0 : i32
    %c0_i32_1 = arith.constant 0 : i32
    return %c0_i32, %c0_i32_0 : i32, i32
  }
  func.func @transform_4(%arg0: i32) -> (i32, i32) {
    %c0_i32 = arith.constant 0 : i32
    %c0_i32_0 = arith.constant 0 : i32
    %c0_i32_1 = arith.constant 0 : i32
    return %c0_i32, %c0_i32_0 : i32, i32
  }
  func.func @transform_5(%arg0: i32) -> (i32, i32) {
    %c0_i32 = arith.constant 0 : i32
    %c0_i32_0 = arith.constant 0 : i32
    %c0_i32_1 = arith.constant 0 : i32
    return %c0_i32, %c0_i32_0 : i32, i32
  }
  func.func @transform_6(%arg0: i32) -> (i32, i32) {
    %c0_i32 = arith.constant 0 : i32
    %c0_i32_0 = arith.constant 0 : i32
    %c0_i32_1 = arith.constant 0 : i32
    return %c0_i32, %c0_i32_0 : i32, i32
  }
  func.func @transform_7(%arg0: i32) -> (i32, i32) {
    %c0_i32 = arith.constant 0 : i32
    %c0_i32_0 = arith.constant 0 : i32
    %c0_i32_1 = arith.constant 0 : i32
    return %c0_i32, %c0_i32_0 : i32, i32
  }
  func.func @transform_8(%arg0: i32) -> (i32, i32) {
    %c0_i32 = arith.constant 0 : i32
    %c0_i32_0 = arith.constant 0 : i32
    %c0_i32_1 = arith.constant 0 : i32
    return %c0_i32, %c0_i32_0 : i32, i32
  }
  func.func @transform_9(%arg0: i32) -> (i32, i32) {
    %c0_i32 = arith.constant 0 : i32
    %c0_i32_0 = arith.constant 0 : i32
    return %arg0, %c0_i32 : i32, i32
  }
}

</mosaic_0001>

<llo_original>
// kernel: mlp_forward.1
$region0: #{mlp_forward.1}
  #allocation0 [shape = 'u32[]', space=smem, size = 0x4, offset = 0x4, fixed_abs, tag = 'smem constant byte address 0x4 - core index']
  #allocation1 [shape = 'u32[72,128]{1,0:T(1,128)}', space=vmem, size = 0x9000, scoped, tag = 'internal scratch']
  %s0 = inlined_call_operand.vmem [shape: f32[32,16], index: 0, kind: input, shape index: {}]
  %s1 = inlined_call_operand.vmem [shape: f32[16,128], index: 1, kind: input, shape index: {}]
  %s2 = inlined_call_operand.vmem [shape: f32[1,128], index: 2, kind: input, shape index: {}]
  %s3 = inlined_call_operand.hbm [shape: f32[128,128], index: 3, kind: input, shape index: {}]
  %s4 = inlined_call_operand.vmem [shape: f32[1,128], index: 4, kind: input, shape index: {}]
  %s5 = inlined_call_operand.hbm [shape: f32[128,128], index: 5, kind: input, shape index: {}]
  %s6 = inlined_call_operand.vmem [shape: f32[1,128], index: 6, kind: input, shape index: {}]
  %s7 = inlined_call_operand.hbm [shape: f32[128,128], index: 7, kind: input, shape index: {}]
  %s8 = inlined_call_operand.vmem [shape: f32[1,128], index: 8, kind: input, shape index: {}]
  %s9 = inlined_call_operand.vmem [shape: f32[32,128], index: 9, kind: output, shape index: {}]
  %s10 = sld [smem:[#allocation0]]
  $region81: #{mlp_forward.1} parent=0
    _
  %s12 = ssub.s32 1, %s10
  %s13 = scalar_select 0, %s12, %s10
  $region1: #{mlp_forward.1} parent=0
    #allocation2 [shape = 'u8[65536]{0}', space=vmem, size = 0x10000, scoped, tag = 'input window, operand 3, single buffered']
    #allocation3 [shape = 's32[2]{0}', space=sflag, size = 0x8, scoped, tag = 'scoped memory for mlp_forward.1']
    #allocation4 [shape = 'u8[65536]{0}', space=vmem, size = 0x10000, scoped, tag = 'input window, operand 5, single buffered']
    #allocation5 [shape = 's32[1]{0}', space=sflag, size = 0x4, scoped, tag = 'scoped memory for mlp_forward.1']
    #allocation6 [shape = 'u8[65536]{0}', space=vmem, size = 0x10000, scoped, tag = 'input window, operand 7, single buffered']
    %14 = vsyncpa [#allocation3], 0
    %15 = vsyncpa [#allocation5], 0
    loop: start=0, step=1, limit=4
    $region2: #{mlp_forward.1} parent=1 // loop_pre_header
      _
    $region3: #{mlp_forward.1} parent=1 // loop_header
      %s17 = sphi 0, %s21
      %p18 = scmp.ge.s32.totalorder %s17, 4
      %s27 = sphi 0, %s29
      %s30 = sphi 0, %s27
      %s31 = sphi 0, %s30
      %s47 = sphi 0, %s31
      %s51 = sphi 0, %s51
      %s53 = sphi 0, %s51
      %s54 = sphi 0, %s53
      %s68 = sphi 0, %s54
      %s72 = sphi 0, %s72
      %s74 = sphi 0, %s72
      %s75 = sphi 0, %s74
      %s89 = sphi 0, %s75
      %s93 = sphi 0, %s93
      %s95 = sphi 0, %s93
      %s96 = sphi 0, %s95
      %s110 = sphi 0, %s96
      %s114 = sphi 0, %s114
      %s116 = sphi 0, %s114
      %s117 = sphi 0, %s116
      %s131 = sphi 0, %s117
      %s135 = sphi 0, %s135
      %s137 = sphi 0, %s135
      %s138 = sphi 0, %s137
      %s152 = sphi 0, %s138
      %s156 = sphi 0, %s156
      %s158 = sphi 0, %s156
      %s159 = sphi 0, %s158
      %s173 = sphi 0, %s159
      %s177 = sphi 0, %s177
      %s179 = sphi 0, %s177
      %s180 = sphi 0, %s179
      %s194 = sphi 0, %s180
      %s198 = sphi 0, %s198
      %s200 = sphi 0, %s198
      %s201 = sphi 0, %s200
      %s215 = sphi 0, %s201
      %s221 = sphi 0, %s223
      %s224 = sphi 0, %s221
      %s225 = sphi 0, %s224
      %s241 = sphi 0, %s225
    $region4: #{mlp_forward.1} parent=1 // loop_header_branch
      %20 = sbr.rel (%p18) target = $region8
    $region5: #{mlp_forward.1} parent=1 // loop_body
      %s22 = ssub.s32 %s17, 1
      %s23 = ssub.s32 %s17, 2
      %s24 = sadd.s32 %s17, 1
      %s25 = ssub.s32 %s17, %s24
      %p26 = scmp.eq.s32.totalorder %s25, 0
      %s28 = sadd.s32 %s27, 1
      %s29 = scalar_select %p26, %s27, %s28
      %p32 = pneg %p26
      %p33 = scmp.eq.s32.totalorder %s17, 1
      %p34 = por %p32, %p33
      %p35 = scmp.ne.s32.totalorder %s27, %s30
      %p36 = scmp.eq.s32.totalorder %s17, 0
      %p37 = por %p35, %p36
      %p38 = scmp.ne.s32.totalorder %s27, %s30
      %p39 = scmp.eq.s32.totalorder %s22, 1
      %p40 = por %p38, %p39
      %p41 = scmp.ne.s32.totalorder %s30, %s31
      %p42 = scmp.eq.s32.totalorder %s22, 0
      %p43 = por %p41, %p42
      %p44 = scmp.ne.s32.totalorder %s30, %s31
      %p45 = scmp.eq.s32.totalorder %s23, 1
      %p46 = por %p44, %p45
      %p48 = scmp.ne.s32.totalorder %s31, %s47
      %p49 = scmp.eq.s32.totalorder %s23, 0
      %p50 = por %p48, %p49
      %s52 = sadd.s32 %s51, 1
      %p55 = scmp.eq.s32.totalorder %s17, 1
      %p56 = scmp.ne.s32.totalorder %s51, %s53
      %p57 = scmp.eq.s32.totalorder %s17, 0
      %p58 = por %p56, %p57
      %p59 = scmp.ne.s32.totalorder %s51, %s53
      %p60 = scmp.eq.s32.totalorder %s22, 1
      %p61 = por %p59, %p60
      %p62 = scmp.ne.s32.totalorder %s53, %s54
      %p63 = scmp.eq.s32.totalorder %s22, 0
      %p64 = por %p62, %p63
      %p65 = scmp.ne.s32.totalorder %s53, %s54
      %p66 = scmp.eq.s32.totalorder %s23, 1
      %p67 = por %p65, %p66
      %p69 = scmp.ne.s32.totalorder %s54, %s68
      %p70 = scmp.eq.s32.totalorder %s23, 0
      %p71 = por %p69, %p70
      %s73 = sadd.s32 %s72, 1
      %p76 = scmp.eq.s32.totalorder %s17, 1
      %p77 = scmp.ne.s32.totalorder %s72, %s74
      %p78 = scmp.eq.s32.totalorder %s17, 0
      %p79 = por %p77, %p78
      %p80 = scmp.ne.s32.totalorder %s72, %s74
      %p81 = scmp.eq.s32.totalorder %s22, 1
      %p82 = por %p80, %p81
      %p83 = scmp.ne.s32.totalorder %s74, %s75
      %p84 = scmp.eq.s32.totalorder %s22, 0
      %p85 = por %p83, %p84
      %p86 = scmp.ne.s32.totalorder %s74, %s75
      %p87 = scmp.eq.s32.totalorder %s23, 1
      %p88 = por %p86, %p87
      %p90 = scmp.ne.s32.totalorder %s75, %s89
      %p91 = scmp.eq.s32.totalorder %s23, 0
      %p92 = por %p90, %p91
      %s94 = sadd.s32 %s93, 1
      %p97 = scmp.eq.s32.totalorder %s17, 1
      %p98 = scmp.ne.s32.totalorder %s93, %s95
      %p99 = scmp.eq.s32.totalorder %s17, 0
      %p100 = por %p98, %p99
      %p101 = scmp.ne.s32.totalorder %s93, %s95
      %p102 = scmp.eq.s32.totalorder %s22, 1
      %p103 = por %p101, %p102
      %p104 = scmp.ne.s32.totalorder %s95, %s96
      %p105 = scmp.eq.s32.totalorder %s22, 0
      %p106 = por %p104, %p105
      %p107 = scmp.ne.s32.totalorder %s95, %s96
      %p108 = scmp.eq.s32.totalorder %s23, 1
      %p109 = por %p107, %p108
      %p111 = scmp.ne.s32.totalorder %s96, %s110
      %p112 = scmp.eq.s32.totalorder %s23, 0
      %p113 = por %p111, %p112
      %s115 = sadd.s32 %s114, 1
      %p118 = scmp.eq.s32.totalorder %s17, 1
      %p119 = scmp.ne.s32.totalorder %s114, %s116
      %p120 = scmp.eq.s32.totalorder %s17, 0
      %p121 = por %p119, %p120
      %p122 = scmp.ne.s32.totalorder %s114, %s116
      %p123 = scmp.eq.s32.totalorder %s22, 1
      %p124 = por %p122, %p123
      %p125 = scmp.ne.s32.totalorder %s116, %s117
      %p126 = scmp.eq.s32.totalorder %s22, 0
      %p127 = por %p125, %p126
      %p128 = scmp.ne.s32.totalorder %s116, %s117
      %p129 = scmp.eq.s32.totalorder %s23, 1
      %p130 = por %p128, %p129
      %p132 = scmp.ne.s32.totalorder %s117, %s131
      %p133 = scmp.eq.s32.totalorder %s23, 0
      %p134 = por %p132, %p133
      %s136 = sadd.s32 %s135, 1
      %p139 = scmp.eq.s32.totalorder %s17, 1
      %p140 = scmp.ne.s32.totalorder %s135, %s137
      %p141 = scmp.eq.s32.totalorder %s17, 0
      %p142 = por %p140, %p141
      %p143 = scmp.ne.s32.totalorder %s135, %s137
      %p144 = scmp.eq.s32.totalorder %s22, 1
      %p145 = por %p143, %p144
      %p146 = scmp.ne.s32.totalorder %s137, %s138
      %p147 = scmp.eq.s32.totalorder %s22, 0
      %p148 = por %p146, %p147
      %p149 = scmp.ne.s32.totalorder %s137, %s138
      %p150 = scmp.eq.s32.totalorder %s23, 1
      %p151 = por %p149, %p150
      %p153 = scmp.ne.s32.totalorder %s138, %s152
      %p154 = scmp.eq.s32.totalorder %s23, 0
      %p155 = por %p153, %p154
      %s157 = sadd.s32 %s156, 1
      %p160 = scmp.eq.s32.totalorder %s17, 1
      %p161 = scmp.ne.s32.totalorder %s156, %s158
      %p162 = scmp.eq.s32.totalorder %s17, 0
      %p163 = por %p161, %p162
      %p164 = scmp.ne.s32.totalorder %s156, %s158
      %p165 = scmp.eq.s32.totalorder %s22, 1
      %p166 = por %p164, %p165
      %p167 = scmp.ne.s32.totalorder %s158, %s159
      %p168 = scmp.eq.s32.totalorder %s22, 0
      %p169 = por %p167, %p168
      %p170 = scmp.ne.s32.totalorder %s158, %s159
      %p171 = scmp.eq.s32.totalorder %s23, 1
      %p172 = por %p170, %p171
      %p174 = scmp.ne.s32.totalorder %s159, %s173
      %p175 = scmp.eq.s32.totalorder %s23, 0
      %p176 = por %p174, %p175
      %s178 = sadd.s32 %s177, 1
      %p181 = scmp.eq.s32.totalorder %s17, 1
      %p182 = scmp.ne.s32.totalorder %s177, %s179
      %p183 = scmp.eq.s32.totalorder %s17, 0
      %p184 = por %p182, %p183
      %p185 = scmp.ne.s32.totalorder %s177, %s179
      %p186 = scmp.eq.s32.totalorder %s22, 1
      %p187 = por %p185, %p186
      %p188 = scmp.ne.s32.totalorder %s179, %s180
      %p189 = scmp.eq.s32.totalorder %s22, 0
      %p190 = por %p188, %p189
      %p191 = scmp.ne.s32.totalorder %s179, %s180
      %p192 = scmp.eq.s32.totalorder %s23, 1
      %p193 = por %p191, %p192
      %p195 = scmp.ne.s32.totalorder %s180, %s194
      %p196 = scmp.eq.s32.totalorder %s23, 0
      %p197 = por %p195, %p196
      %s199 = sadd.s32 %s198, 1
      %p202 = scmp.eq.s32.totalorder %s17, 1
      %p203 = scmp.ne.s32.totalorder %s198, %s200
      %p204 = scmp.eq.s32.totalorder %s17, 0
      %p205 = por %p203, %p204
      %p206 = scmp.ne.s32.totalorder %s198, %s200
      %p207 = scmp.eq.s32.totalorder %s22, 1
      %p208 = por %p206, %p207
      %p209 = scmp.ne.s32.totalorder %s200, %s201
      %p210 = scmp.eq.s32.totalorder %s22, 0
      %p211 = por %p209, %p210
      %p212 = scmp.ne.s32.totalorder %s200, %s201
      %p213 = scmp.eq.s32.totalorder %s23, 1
      %p214 = por %p212, %p213
      %p216 = scmp.ne.s32.totalorder %s201, %s215
      %p217 = scmp.eq.s32.totalorder %s23, 0
      %p218 = por %p216, %p217
      %s219 = ssub.s32 %s17, %s24
      %p220 = scmp.eq.s32.totalorder %s219, 0
      %s222 = sadd.s32 %s221, 1
      %s223 = scalar_select %p220, %s221, %s222
      %p226 = pneg %p220
      %p227 = scmp.eq.s32.totalorder %s17, 1
      %p228 = por %p226, %p227
      %p229 = scmp.ne.s32.totalorder %s221, %s224
      %p230 = scmp.eq.s32.totalorder %s17, 0
      %p231 = por %p229, %p230
      %p232 = scmp.ne.s32.totalorder %s221, %s224
      %p233 = scmp.eq.s32.totalorder %s22, 1
      %p234 = por %p232, %p233
      %p235 = scmp.ne.s32.totalorder %s224, %s225
      %p236 = scmp.eq.s32.totalorder %s22, 0
      %p237 = por %p235, %p236
      %p238 = scmp.ne.s32.totalorder %s224, %s225
      %p239 = scmp.eq.s32.totalorder %s23, 1
      %p240 = por %p238, %p239
      %p242 = scmp.ne.s32.totalorder %s225, %s241
      %p243 = scmp.eq.s32.totalorder %s23, 0
      %p244 = por %p242, %p243
      %p245 = scmp.le.s32.totalorder 1, %s17
      %p246 = scmp.lt.s32.totalorder %s17, 3
      %p247 = pnand %p245, %p246
      %p248 = pneg %p247
      // Predicated region
      $region9: #{mlp_forward.1} parent=5 // pred_check
        _
      $region10: #{mlp_forward.1} parent=5 // pred_check_branch
        %250 = sbr.rel (%p247) target = $region12
      $region11: #{mlp_forward.1} parent=5 // pred_region
        %s251 = ssub.s32 %s17, 1
        // Predicated region
        $region13: #{mlp_forward.1} parent=11 // pred_check
          %p252 = pneg %p64
        $region14: #{mlp_forward.1} parent=11 // pred_check_branch
          %254 = sbr.rel (%p252) target = $region16
        $region15: #{mlp_forward.1} parent=11 // pred_region
          _
        $region16: #{mlp_forward.1} parent=11 // pred_fallthru
          _
        // Predicated region
        $region17: #{mlp_forward.1} parent=11 // pred_check
          %p255 = pneg %p85
        $region18: #{mlp_forward.1} parent=11 // pred_check_branch
          %257 = sbr.rel (%p255) target = $region20
        $region19: #{mlp_forward.1} parent=11 // pred_region
          _
        $region20: #{mlp_forward.1} parent=11 // pred_fallthru
          _
        // Predicated region
        $region21: #{mlp_forward.1} parent=11 // pred_check
          %p258 = pneg %p106
        $region22: #{mlp_forward.1} parent=11 // pred_check_branch
          %260 = sbr.rel (%p258) target = $region24
        $region23: #{mlp_forward.1} parent=11 // pred_region
          %262 = vsyncadd [#allocation3], 0
          %s263 = sshll.u32 %s3, 4
          %s264 = int_to_ptr.hbm [resolvable:$true] %s263
          %s265 = sshll.u32 [#allocation2], 4
          %s266 = int_to_ptr.vmem [resolvable:$true] %s265
          %271 = dma.hbm_to_vmem [thread:$0]  %s264, 2048, %s266, [#allocation3], 128, 128, 8
        $region24: #{mlp_forward.1} parent=11 // pred_fallthru
          _
        // Predicated region
        $region25: #{mlp_forward.1} parent=11 // pred_check
          %p272 = pneg %p127
        $region26: #{mlp_forward.1} parent=11 // pred_check_branch
          %274 = sbr.rel (%p272) target = $region28
        $region27: #{mlp_forward.1} parent=11 // pred_region
          _
        $region28: #{mlp_forward.1} parent=11 // pred_fallthru
          _
        // Predicated region
        $region29: #{mlp_forward.1} parent=11 // pred_check
          %p275 = pneg %p148
        $region30: #{mlp_forward.1} parent=11 // pred_check_branch
          %277 = sbr.rel (%p275) target = $region32
        $region31: #{mlp_forward.1} parent=11 // pred_region
          %279 = vsyncadd [#allocation5], 0
          %s280 = sshll.u32 %s5, 4
          %s281 = int_to_ptr.hbm [resolvable:$true] %s280
          %s282 = sshll.u32 [#allocation4], 4
          %s283 = int_to_ptr.vmem [resolvable:$true] %s282
          %288 = dma.hbm_to_vmem [thread:$0]  %s281, 2048, %s283, [#allocation5], 128, 128, 8
        $region32: #{mlp_forward.1} parent=11 // pred_fallthru
          _
        // Predicated region
        $region33: #{mlp_forward.1} parent=11 // pred_check
          %p289 = pneg %p169
        $region34: #{mlp_forward.1} parent=11 // pred_check_branch
          %291 = sbr.rel (%p289) target = $region36
        $region35: #{mlp_forward.1} parent=11 // pred_region
          _
        $region36: #{mlp_forward.1} parent=11 // pred_fallthru
          _
        // Predicated region
        $region37: #{mlp_forward.1} parent=11 // pred_check
          %p292 = pneg %p190
        $region38: #{mlp_forward.1} parent=11 // pred_check_branch
          %294 = sbr.rel (%p292) target = $region40
        $region39: #{mlp_forward.1} parent=11 // pred_region
          %296 = vsyncadd [#allocation5], 0
          %s297 = sshll.u32 %s7, 4
          %s298 = int_to_ptr.hbm [resolvable:$true] %s297
          %s299 = sshll.u32 [#allocation6], 4
          %s300 = int_to_ptr.vmem [resolvable:$true] %s299
          %305 = dma.hbm_to_vmem [thread:$0]  %s298, 2048, %s300, [#allocation5], 128, 128, 8
        $region40: #{mlp_forward.1} parent=11 // pred_fallthru
          _
        // Predicated region
        $region41: #{mlp_forward.1} parent=11 // pred_check
          %p306 = pneg %p211
        $region42: #{mlp_forward.1} parent=11 // pred_check_branch
          %308 = sbr.rel (%p306) target = $region44
        $region43: #{mlp_forward.1} parent=11 // pred_region
          _
        $region44: #{mlp_forward.1} parent=11 // pred_fallthru
          _
      $region12: #{mlp_forward.1} parent=5 // pred_fallthru
        _
      %p309 = scmp.lt.s32.totalorder %s17, 2
      // Predicated region
      $region45: #{mlp_forward.1} parent=5 // pred_check
        %p310 = pneg %p309
      $region46: #{mlp_forward.1} parent=5 // pred_check_branch
        %312 = sbr.rel (%p310) target = $region48
      $region47: #{mlp_forward.1} parent=5 // pred_region
        // Predicated region
        $region49: #{mlp_forward.1} parent=47 // pred_check
          %p313 = pneg %p37
        $region50: #{mlp_forward.1} parent=47 // pred_check_branch
          %315 = sbr.rel (%p313) target = $region52
        $region51: #{mlp_forward.1} parent=47 // pred_region
          %s316 = smul.u32 2, %s17
          %p317 = scmp.lt.s32.totalorder %s316, 3
          %s318 = scalar_select %p317, %s316, 3
          %s319 = smul.addr %s318, 8
          %s320 = scalar_lea.vmem %s0, %s319
          %s321 = smul.u32 2, %s17
        $region52: #{mlp_forward.1} parent=47 // pred_fallthru
          _
      $region48: #{mlp_forward.1} parent=5 // pred_fallthru
        _
      %p322 = scmp.le.s32.totalorder 1, %s17
      %p323 = scmp.lt.s32.totalorder %s17, 3
      %p324 = pnand %p322, %p323
      %p325 = pneg %p324
      // Predicated region
      $region53: #{mlp_forward.1} parent=5 // pred_check
        _
      $region54: #{mlp_forward.1} parent=5 // pred_check_branch
        %327 = sbr.rel (%p324) target = $region56
      $region55: #{mlp_forward.1} parent=5 // pred_region
        %s328 = ssub.s32 %s17, 1
        // Predicated region
        $region57: #{mlp_forward.1} parent=55 // pred_check
          %p329 = pneg %p106
        $region58: #{mlp_forward.1} parent=55 // pred_check_branch
          %331 = sbr.rel (%p329) target = $region60
        $region59: #{mlp_forward.1} parent=55 // pred_region
          %333 = dma.done [#allocation3], 2048
        $region60: #{mlp_forward.1} parent=55 // pred_fallthru
          _
        // Predicated region
        $region61: #{mlp_forward.1} parent=55 // pred_check
          %p334 = pneg %p148
        $region62: #{mlp_forward.1} parent=55 // pred_check_branch
          %336 = sbr.rel (%p334) target = $region64
        $region63: #{mlp_forward.1} parent=55 // pred_region
          %338 = dma.done [#allocation5], 2048
        $region64: #{mlp_forward.1} parent=55 // pred_fallthru
          _
        // Predicated region
        $region65: #{mlp_forward.1} parent=55 // pred_check
          %p339 = pneg %p190
        $region66: #{mlp_forward.1} parent=55 // pred_check_branch
          %341 = sbr.rel (%p339) target = $region68
        $region67: #{mlp_forward.1} parent=55 // pred_region
          %343 = dma.done [#allocation5], 2048
        $region68: #{mlp_forward.1} parent=55 // pred_fallthru
          _
        %s344 = smul.u32 2, %s22
        %p345 = scmp.lt.s32.totalorder %s344, 3
        %s346 = scalar_select %p345, %s344, 3
        %s347 = smul.addr %s346, 8
        %s348 = scalar_lea.vmem %s0, %s347
        %p349 = pneg %p43
        %p350 = pneg %p40
        %p351 = pneg %p64
        %p352 = pneg %p61
        %p353 = pneg %p85
        %p354 = pneg %p82
        %p355 = pneg %p106
        %p356 = pneg %p103
        %p357 = pneg %p127
        %p358 = pneg %p124
        %p359 = pneg %p148
        %p360 = pneg %p145
        %p361 = pneg %p169
        %p362 = pneg %p166
        %p363 = pneg %p190
        %p364 = pneg %p187
        %p365 = pneg %p211
        %p366 = pneg %p208
        %p367 = pneg %p237
        %p368 = pneg %p234
        %s369 = smul.u32 2, %s22
        %p370 = scmp.lt.s32.totalorder %s369, 3
        %s371 = scalar_select %p370, %s369, 3
        %s372 = smul.addr %s371, 8
        %s373 = scalar_lea.vmem %s9, %s372
        %s374 = smul.u32 2, %s22
        %p375 = scmp.lt.s32.totalorder %s374, 3
        %s376 = scalar_select %p375, %s374, 3
        %s377 = smul.addr %s376, 8
        %s378 = scalar_lea.vmem %s0, %s377
        %s379 = smul.u32 2, %s22
        %s380 = smul.u32 2, %s22
        %p381 = scmp.lt.s32.totalorder %s380, 3
        %s382 = scalar_select %p381, %s380, 3
        %s383 = smul.addr %s382, 8
        %s384 = scalar_lea.vmem %s9, %s383
        %s385 = smul.u32 2, %s22
        %v386 = vld [vmem:[%s378] sm:$0xff]
        %v387 = vld [vmem:[%s378 + $0x8] sm:$0xff]
        %v388 = vld [vmem:[%s1] sm:$0xff]
        %v389 = vld [vmem:[%s1 + $0x8] sm:$0xff]
        %v390 = vld [vmem:[%s2] sm:$0x1]
        %v392 = vperm.slane %v390, 0
        %vm394 = vcmask 130048
        %v396 = vsel %vm394, %v386, 0
        %v399 = vsel %vm394, %v387, 0
        %401 = vmatpush.msra.mxu0 0.0
        %402 = vmatpush.msra.mxu0 0.0
        %403 = vmatpush.msra.mxu0 0.0
        %404 = vmatpush.msra.mxu0 0.0
        %405 = vmatpush.msra.mxu0 0.0
        %406 = vmatpush.msra.mxu0 0.0
        %407 = vmatpush.msra.mxu0 0.0
        %408 = vmatpush.msra.mxu0 0.0
        %409 = vmatpush.msra.mxu0 0.0
        %410 = vmatpush.msra.mxu0 0.0
        %411 = vmatpush.msra.mxu0 0.0
        %412 = vmatpush.msra.mxu0 0.0
        %413 = vmatpush.msra.mxu0 0.0
        %414 = vmatpush.msra.mxu0 0.0
        %415 = vmatpush.msra.mxu0 %v389
        %416 = vmatpush.msra.mxu0 %v388
        %417 = vmatmul.f32.gmra.mxu0 %v396
        %v418 = vpop.f32.mrf.mxu0
        %v419 = vadd.f32 %v392, %v418
        %420 = vmatmul.f32.gmra.mxu0 %v399
        %v421 = vpop.f32.mrf.mxu0
        %v422 = vadd.f32 %v392, %v421
        %423 = vdwg.mxu0
        %v424 = vtanh.pop %v419
        %v425 = vtanh.pop %v422
        %v426 = vld [vmem:[#allocation2] sm:$0xff]
        %v427 = vld [vmem:[#allocation2 + $0x8] sm:$0xff]
        %v428 = vld [vmem:[#allocation2 + $0x10] sm:$0xff]
        %v429 = vld [vmem:[#allocation2 + $0x18] sm:$0xff]
        %v430 = vld [vmem:[#allocation2 + $0x20] sm:$0xff]
        %v431 = vld [vmem:[#allocation2 + $0x28] sm:$0xff]
        %v432 = vld [vmem:[#allocation2 + $0x30] sm:$0xff]
        %v433 = vld [vmem:[#allocation2 + $0x38] sm:$0xff]
        %v434 = vld [vmem:[#allocation2 + $0x40] sm:$0xff]
        %v435 = vld [vmem:[#allocation2 + $0x48] sm:$0xff]
        %v436 = vld [vmem:[#allocation2 + $0x50] sm:$0xff]
        %v437 = vld [vmem:[#allocation2 + $0x58] sm:$0xff]
        %v438 = vld [vmem:[#allocation2 + $0x60] sm:$0xff]
        %v439 = vld [vmem:[#allocation2 + $0x68] sm:$0xff]
        %v440 = vld [vmem:[#allocation2 + $0x70] sm:$0xff]
        %v441 = vld [vmem:[#allocation2 + $0x78] sm:$0xff]
        %v442 = vld [vmem:[%s4] sm:$0x1]
        %v444 = vperm.slane %v442, 0
        %446 = vmatpush.msra.mxu0 %v441
        %447 = vmatpush.msra.mxu0 %v440
        %448 = vmatpush.msra.mxu0 %v439
        %449 = vmatpush.msra.mxu0 %v438
        %450 = vmatpush.msra.mxu0 %v437
        %451 = vmatpush.msra.mxu0 %v436
        %452 = vmatpush.msra.mxu0 %v435
        %453 = vmatpush.msra.mxu0 %v434
        %454 = vmatpush.msra.mxu0 %v433
        %455 = vmatpush.msra.mxu0 %v432
        %456 = vmatpush.msra.mxu0 %v431
        %457 = vmatpush.msra.mxu0 %v430
        %458 = vmatpush.msra.mxu0 %v429
        %459 = vmatpush.msra.mxu0 %v428
        %460 = vmatpush.msra.mxu0 %v427
        %461 = vmatpush.msra.mxu0 %v426
        %462 = vmatmul.f32.gmra.mxu0 %v424
        %v463 = vpop.f32.mrf.mxu0
        %v464 = vadd.f32 %v444, %v463
        %465 = vmatmul.f32.gmra.mxu0 %v425
        %v466 = vpop.f32.mrf.mxu0
        %v467 = vadd.f32 %v444, %v466
        %468 = vdwg.mxu0
        %v469 = vtanh.pop %v464
        %v470 = vtanh.pop %v467
        %v471 = vld [vmem:[#allocation4] sm:$0xff]
        %v472 = vld [vmem:[#allocation4 + $0x8] sm:$0xff]
        %v473 = vld [vmem:[#allocation4 + $0x10] sm:$0xff]
        %v474 = vld [vmem:[#allocation4 + $0x18] sm:$0xff]
        %v475 = vld [vmem:[#allocation4 + $0x20] sm:$0xff]
        %v476 = vld [vmem:[#allocation4 + $0x28] sm:$0xff]
        %v477 = vld [vmem:[#allocation4 + $0x30] sm:$0xff]
        %v478 = vld [vmem:[#allocation4 + $0x38] sm:$0xff]
        %v479 = vld [vmem:[#allocation4 + $0x40] sm:$0xff]
        %v480 = vld [vmem:[#allocation4 + $0x48] sm:$0xff]
        %v481 = vld [vmem:[#allocation4 + $0x50] sm:$0xff]
        %v482 = vld [vmem:[#allocation4 + $0x58] sm:$0xff]
        %v483 = vld [vmem:[#allocation4 + $0x60] sm:$0xff]
        %v484 = vld [vmem:[#allocation4 + $0x68] sm:$0xff]
        %v485 = vld [vmem:[#allocation4 + $0x70] sm:$0xff]
        %v486 = vld [vmem:[#allocation4 + $0x78] sm:$0xff]
        %v487 = vld [vmem:[%s6] sm:$0x1]
        %v489 = vperm.slane %v487, 0
        %491 = vmatpush.msra.mxu0 %v486
        %492 = vmatpush.msra.mxu0 %v485
        %493 = vmatpush.msra.mxu0 %v484
        %494 = vmatpush.msra.mxu0 %v483
        %495 = vmatpush.msra.mxu0 %v482
        %496 = vmatpush.msra.mxu0 %v481
        %497 = vmatpush.msra.mxu0 %v480
        %498 = vmatpush.msra.mxu0 %v479
        %499 = vmatpush.msra.mxu0 %v478
        %500 = vmatpush.msra.mxu0 %v477
        %501 = vmatpush.msra.mxu0 %v476
        %502 = vmatpush.msra.mxu0 %v475
        %503 = vmatpush.msra.mxu0 %v474
        %504 = vmatpush.msra.mxu0 %v473
        %505 = vmatpush.msra.mxu0 %v472
        %506 = vmatpush.msra.mxu0 %v471
        %507 = vmatmul.f32.gmra.mxu0 %v469
        %v508 = vpop.f32.mrf.mxu0
        %v509 = vadd.f32 %v489, %v508
        %510 = vmatmul.f32.gmra.mxu0 %v470
        %v511 = vpop.f32.mrf.mxu0
        %v512 = vadd.f32 %v489, %v511
        %513 = vdwg.mxu0
        %v514 = vtanh.pop %v509
        %v515 = vtanh.pop %v512
        %v516 = vld [vmem:[#allocation6] sm:$0xff]
        %v517 = vld [vmem:[#allocation6 + $0x8] sm:$0xff]
        %v518 = vld [vmem:[#allocation6 + $0x10] sm:$0xff]
        %v519 = vld [vmem:[#allocation6 + $0x18] sm:$0xff]
        %v520 = vld [vmem:[#allocation6 + $0x20] sm:$0xff]
        %v521 = vld [vmem:[#allocation6 + $0x28] sm:$0xff]
        %v522 = vld [vmem:[#allocation6 + $0x30] sm:$0xff]
        %v523 = vld [vmem:[#allocation6 + $0x38] sm:$0xff]
        %v524 = vld [vmem:[#allocation6 + $0x40] sm:$0xff]
        %v525 = vld [vmem:[#allocation6 + $0x48] sm:$0xff]
        %v526 = vld [vmem:[#allocation6 + $0x50] sm:$0xff]
        %v527 = vld [vmem:[#allocation6 + $0x58] sm:$0xff]
        %v528 = vld [vmem:[#allocation6 + $0x60] sm:$0xff]
        %v529 = vld [vmem:[#allocation6 + $0x68] sm:$0xff]
        %v530 = vld [vmem:[#allocation6 + $0x70] sm:$0xff]
        %v531 = vld [vmem:[#allocation6 + $0x78] sm:$0xff]
        %v532 = vld [vmem:[%s8] sm:$0x1]
        %v534 = vperm.slane %v532, 0
        %536 = vmatpush.msra.mxu0 %v531
        %537 = vmatpush.msra.mxu0 %v530
        %538 = vmatpush.msra.mxu0 %v529
        %539 = vmatpush.msra.mxu0 %v528
        %540 = vmatpush.msra.mxu0 %v527
        %541 = vmatpush.msra.mxu0 %v526
        %542 = vmatpush.msra.mxu0 %v525
        %543 = vmatpush.msra.mxu0 %v524
        %544 = vmatpush.msra.mxu0 %v523
        %545 = vmatpush.msra.mxu0 %v522
        %546 = vmatpush.msra.mxu0 %v521
        %547 = vmatpush.msra.mxu0 %v520
        %548 = vmatpush.msra.mxu0 %v519
        %549 = vmatpush.msra.mxu0 %v518
        %550 = vmatpush.msra.mxu0 %v517
        %551 = vmatpush.msra.mxu0 %v516
        %552 = vmatmul.f32.gmra.mxu0 %v514
        %v553 = vpop.f32.mrf.mxu0
        %v554 = vadd.f32 %v534, %v553
        %555 = vmatmul.f32.gmra.mxu0 %v515
        %v556 = vpop.f32.mrf.mxu0
        %v557 = vadd.f32 %v534, %v556
        %558 = vdwg.mxu0
        %v559 = vtanh.pop %v554
        %v560 = vtanh.pop %v557
        %561 = vst [vmem:[%s384] sm:$0xff] %v559
        %562 = vst [vmem:[%s384 + $0x8] sm:$0xff] %v560
        %s563 = smul.u32 2, %s22
        %p564 = scmp.lt.s32.totalorder %s563, 3
        %s565 = scalar_select %p564, %s563, 3
        %s566 = smul.addr %s565, 8
        %s567 = scalar_lea.vmem %s9, %s566
        // Predicated region
        $region69: #{mlp_forward.1} parent=55 // pred_check
          %p568 = pneg %p234
        $region70: #{mlp_forward.1} parent=55 // pred_check_branch
          %570 = sbr.rel (%p568) target = $region72
        $region71: #{mlp_forward.1} parent=55 // pred_region
          %s571 = smul.u32 2, %s22
        $region72: #{mlp_forward.1} parent=55 // pred_fallthru
          _
      $region56: #{mlp_forward.1} parent=5 // pred_fallthru
        _
      %p572 = scmp.le.s32.totalorder 2, %s17
      // Predicated region
      $region73: #{mlp_forward.1} parent=5 // pred_check
        %p573 = pneg %p572
      $region74: #{mlp_forward.1} parent=5 // pred_check_branch
        %575 = sbr.rel (%p573) target = $region76
      $region75: #{mlp_forward.1} parent=5 // pred_region
        %s576 = ssub.s32 %s17, 2
        // Predicated region
        $region77: #{mlp_forward.1} parent=75 // pred_check
          %p577 = pneg %p240
        $region78: #{mlp_forward.1} parent=75 // pred_check_branch
          %579 = sbr.rel (%p577) target = $region80
        $region79: #{mlp_forward.1} parent=75 // pred_region
          %s580 = smul.u32 2, %s23
          %p581 = scmp.lt.s32.totalorder %s580, 3
          %s582 = scalar_select %p581, %s580, 3
          %s583 = smul.addr %s582, 8
          %s584 = scalar_lea.vmem %s9, %s583
        $region80: #{mlp_forward.1} parent=75 // pred_fallthru
          _
      $region76: #{mlp_forward.1} parent=5 // pred_fallthru
        _
    $region6: #{mlp_forward.1} parent=1 // loop_footer
      %s21 = sadd.s32 1, %s17
    $region7: #{mlp_forward.1} parent=1 // loop_footer_branch
      %16 = sbr.rel target = $region3
    $region8: #{mlp_forward.1} parent=1 // loop_exit
      _
    %585 = vsyncpa [#allocation3], 1
    %s586 = scalar_lea.sflag [#allocation3], 1
    %587 = vsyncpa %s586, 1
    %588 = vsyncpa [#allocation5], 1

</llo_original>
